<compile_context>
chip_gen: v7x
topology: tpu7x:2x2x1
jax: 0.10.0
libtpu: 0.0.40
codegen_flags: <defaults>
</compile_context>

<pallas_src>
import jax
import jax.numpy as jnp
from jax import lax
from jax.experimental import pallas as pl
from jax.experimental.pallas import tpu as pltpu


def _round_up(x, m):
    return ((x + m - 1) // m) * m


def _make_kernel(*, focal: bool, n_rows: int, gamma: float):
    """Class-major kernel: x_ref / t_ref are (C, tm) tiles, batch rows on lanes."""

    def kernel(x_ref, t_ref, out_ref):
        _, tm = x_ref.shape
        x = x_ref[...].astype(jnp.float32)       # (C, tm)
        t = t_ref[...].astype(jnp.float32)       # (C, tm)

        # Mask tail lanes: grid = cdiv(N, tm), so the last tile's out-of-bounds
        # lanes hold garbage.  Mask BOTH operands so NaN/Inf bits cannot leak.
        col = lax.broadcasted_iota(jnp.int32, (1, tm), 1) + pl.program_id(0) * tm
        valid = col < n_rows                      # (1, tm)
        x = jnp.where(valid, x, 0.0)
        t = jnp.where(valid, t, 0.0)

        # target normalization per batch row: t / where(sum != 0, sum, 1)
        tsum = jnp.sum(t, axis=0, keepdims=True)                  # (1, tm)
        t = t * (1.0 / jnp.where(tsum != 0.0, tsum, 1.0))

        # numerically stable log-softmax over classes (sublane axis)
        m = jnp.max(x, axis=0, keepdims=True)                     # (1, tm)
        z = x - m
        ez = jnp.exp(z)                                           # (C, tm)
        se = jnp.sum(ez, axis=0, keepdims=True)                   # (1, tm)
        lsm = z - jnp.log(se)                                     # (C, tm)

        if focal:
            # 1 - softmax without cancellation: (se - ez)/se, se >= ez elementwise,
            # exact reciprocal computed once on the (1, tm) row.  No clamp needed.
            inv_se = 1.0 / se
            one_minus_p = (se - ez) * inv_se
            # base**gamma == exp(gamma * log(base)); log(0) -> -inf -> exp -> 0,
            # matching torch.pow(0., gamma) == 0 for the fully-confident class.
            w = jnp.exp(jnp.float32(gamma) * jnp.log(one_minus_p))
            loss = t * w * lsm
        else:
            # TODO(synk): optional per-class `weight` divisor not plumbed
            # (module default is None).
            loss = t * lsm

        # Per-row loss: cheap sublane reduction -> lane-dense (1, tm), unmasked store.
        out_ref[...] = -jnp.sum(loss, axis=0, keepdims=True)

    return kernel


def multi_cross_entropy_loss(logits, target, *, focal=False, reduce=True,
                             gamma_f=0.05, weight=None, tm=8192,
                             class_major_inputs=False):
    """Pallas TPU implementation of MultiCrossEntropyLoss.forward (weight=None).

    logits/target: [N, C] (PyTorch convention).  If the producer can emit the
    class-major layout [C, N], pass class_major_inputs=True to skip the relayout.
    """
    if weight is not None:
        # TODO(synk): per-class weight divisor of the non-focal branch not implemented.
        raise NotImplementedError("weight divisor not implemented")
    del gamma_f  # pos_neg == ones at module init -> gamma stays uniform 0.025.

    if class_major_inputs:
        C, N = logits.shape
        x_cm, t_cm = logits, target
    else:
        N, C = logits.shape
        # One relayout pass; ideally the producer emits [C, N] and this is free.
        x_cm = logits.T
        t_cm = target.T

    # Tile selection: lane-aligned (multiple of 128) batch tiles, no HBM padding.
    # Cap the tile so large batches give >= 2 grid steps (v7x megacore sharding).
    if N <= 128:
        tm_eff = N                                   # single full block (tiny batch)
    else:
        tm_eff = min(max(int(tm), 128), _round_up(pl.cdiv(N, 2), 128))
    grid = pl.cdiv(N, tm_eff)
    n_out = grid * tm_eff                            # lane-aligned output width

    # TODO(synk): gamma is baked to the init value (0.025 per class); if the module's
    # pos_neg buffer had been updated by collect_grad, per-class gamma would differ.
    kernel = _make_kernel(focal=focal, n_rows=N, gamma=0.025)

    rows = pl.pallas_call(
        kernel,
        out_shape=jax.ShapeDtypeStruct((1, n_out), jnp.float32),
        grid_spec=pltpu.PrefetchScalarGridSpec(
            num_scalar_prefetch=0,
            grid=(grid,),
            in_specs=[
                pl.BlockSpec((C, tm_eff), lambda i: (0, i)),
                pl.BlockSpec((C, tm_eff), lambda i: (0, i)),
            ],
            out_specs=pl.BlockSpec((1, tm_eff), lambda i: (0, i)),
        ),
        compiler_params=pltpu.CompilerParams(
            dimension_semantics=("parallel",),        # no cross-step state
            vmem_limit_bytes=48 * 1024 * 1024,        # headroom even on v7x's 64 MiB
        ),
    )(x_cm, t_cm)

    if reduce:
        # Masked tail lanes are written as exact zeros, so the padded sum is exact.
        return jnp.sum(rows) / N
    return rows[0, :N]


def _reference(logits, target, focal=False, reduce=True):
    logits = logits.astype(jnp.float32)
    target = target.astype(jnp.float32)
    C = logits.shape[-1]
    tsum = jnp.sum(target, axis=1)
    tdiv = jnp.where(tsum != 0, tsum, jnp.ones_like(tsum))[:, None]
    target = target / tdiv
    lsm = jax.nn.log_softmax(logits, axis=1)
    if focal:
        gamma = jnp.full((C,), 0.025, dtype=jnp.float32)
        p = jax.nn.softmax(logits, axis=1)
        out = jnp.sum(-target * (1.0 - p) ** gamma[None, :] * lsm, axis=1)
    else:
        out = jnp.sum(-target * lsm, axis=1)
    return jnp.mean(out) if reduce else out


if __name__ == "__main__":
    key = jax.random.PRNGKey(0)
    k1, k2, k3, k4 = jax.random.split(key, 4)

    # Small test: batch=16 rows, num_classes=23 (module default).
    N, C = 16, 23
    logits = jax.random.normal(k1, (N, C), dtype=jnp.float32)
    target = (jax.random.uniform(k2, (N, C)) > 0.7).astype(jnp.float32)
    target = target.at[3].set(0.0)   # exercise the where(sum != 0, sum, 1) path

    loss = jax.block_until_ready(multi_cross_entropy_loss(logits, target))
    ref = _reference(logits, target)
    assert jnp.allclose(loss, ref, rtol=1e-5, atol=1e-5), (loss, ref)

    rows = jax.block_until_ready(
        multi_cross_entropy_loss(logits, target, reduce=False))
    ref_rows = _reference(logits, target, reduce=False)
    assert jnp.allclose(rows, ref_rows, rtol=1e-5, atol=1e-5), (rows, ref_rows)

    loss_f = jax.block_until_ready(
        multi_cross_entropy_loss(logits, target, focal=True))
    ref_f = _reference(logits, target, focal=True)
    assert jnp.allclose(loss_f, ref_f, rtol=1e-4, atol=1e-4), (loss_f, ref_f)

    # Class-major producer layout (skips the wrapper relayout entirely).
    loss_cm = jax.block_until_ready(
        multi_cross_entropy_loss(logits.T, target.T, class_major_inputs=True))
    assert jnp.allclose(loss_cm, ref, rtol=1e-5, atol=1e-5), (loss_cm, ref)

    # Larger, non-tile-divisible batch: multi-step parallel grid + in-kernel tail mask.
    N2 = 300
    logits2 = jax.random.normal(k3, (N2, C), dtype=jnp.float32)
    target2 = (jax.random.uniform(k4, (N2, C)) > 0.7).astype(jnp.float32)
    rows2 = jax.block_until_ready(
        multi_cross_entropy_loss(logits2, target2, reduce=False, tm=256))
    ref_rows2 = _reference(logits2, target2, reduce=False)
    assert jnp.allclose(rows2, ref_rows2, rtol=1e-5, atol=1e-5)

    loss2_f = jax.block_until_ready(
        multi_cross_entropy_loss(logits2, target2, focal=True, reduce=True, tm=256))
    ref2_f = _reference(logits2, target2, focal=True, reduce=True)
    assert jnp.allclose(loss2_f, ref2_f, rtol=1e-4, atol=1e-4), (loss2_f, ref2_f)

    print("KERNEL_OK")
</pallas_src>

<mosaic_0001>
module attributes {stable_mosaic.version = 11 : i64} {
  func.func @kernel(%arg0: i32, %arg1: memref<23x16xf32, #tpu.memory_space<vmem>>, %arg2: memref<23x16xf32, #tpu.memory_space<vmem>>, %arg3: memref<1x16xf32, #tpu.memory_space<vmem>>) attributes {dimension_semantics = [#tpu.dimension_semantics<parallel>], iteration_bounds = array<i64: 1>, scalar_prefetch = 0 : i64, scratch_operands = 0 : i64, tpu.core_type = #tpu.core_type<tc>, window_params = [{transform_indices = @transform_0, window_bounds = array<i64: 23, 16>}, {transform_indices = @transform_1, window_bounds = array<i64: 23, 16>}, {transform_indices = @transform_2, window_bounds = array<i64: 1, 16>}]} {
    %c0 = arith.constant 0 : index
    %c0_0 = arith.constant 0 : index
    %0 = vector.load %arg1[%c0, %c0_0] : memref<23x16xf32, #tpu.memory_space<vmem>>, vector<23x16xf32>
    %c0_1 = arith.constant 0 : index
    %c0_2 = arith.constant 0 : index
    %1 = vector.load %arg2[%c0_1, %c0_2] : memref<23x16xf32, #tpu.memory_space<vmem>>, vector<23x16xf32>
    %2 = tpu.iota {dimensions = array<i32: 1>} : vector<1x16xi32>
    %c16_i32 = arith.constant 16 : i32
    %3 = arith.muli %arg0, %c16_i32 : i32
    %4 = vector.broadcast %3 : i32 to vector<1x16xi32>
    %5 = arith.addi %2, %4 : vector<1x16xi32>
    %c16_i32_3 = arith.constant 16 : i32
    %6 = vector.broadcast %c16_i32_3 : i32 to vector<1x16xi32>
    %7 = arith.cmpi slt, %5, %6 : vector<1x16xi32>
    %cst = arith.constant 0.000000e+00 : f32
    %8 = vector.shape_cast %7 : vector<1x16xi1> to vector<1x16xi1>
    %9 = vector.broadcast %8 : vector<1x16xi1> to vector<23x16xi1>
    %10 = vector.broadcast %cst : f32 to vector<23x16xf32>
    %11 = arith.select %9, %0, %10 : vector<23x16xi1>, vector<23x16xf32>
    %cst_4 = arith.constant 0.000000e+00 : f32
    %12 = vector.shape_cast %7 : vector<1x16xi1> to vector<1x16xi1>
    %13 = vector.broadcast %12 : vector<1x16xi1> to vector<23x16xi1>
    %14 = vector.broadcast %cst_4 : f32 to vector<23x16xf32>
    %15 = arith.select %13, %1, %14 : vector<23x16xi1>, vector<23x16xf32>
    %cst_5 = arith.constant dense<0.000000e+00> : vector<16xf32>
    %16 = vector.multi_reduction <add>, %15, %cst_5 [0] : vector<23x16xf32> to vector<16xf32>
    %17 = vector.shape_cast %16 : vector<16xf32> to vector<1x16xf32>
    %cst_6 = arith.constant 0.000000e+00 : f32
    %18 = vector.broadcast %cst_6 : f32 to vector<1x16xf32>
    %19 = arith.cmpf one, %17, %18 : vector<1x16xf32>
    %cst_7 = arith.constant 1.000000e+00 : f32
    %20 = vector.broadcast %cst_7 : f32 to vector<1x16xf32>
    %21 = arith.select %19, %17, %20 : vector<1x16xi1>, vector<1x16xf32>
    %cst_8 = arith.constant 1.000000e+00 : f32
    %22 = vector.broadcast %cst_8 : f32 to vector<1x16xf32>
    %23 = arith.divf %22, %21 : vector<1x16xf32>
    %24 = vector.broadcast %23 : vector<1x16xf32> to vector<23x16xf32>
    %25 = arith.mulf %15, %24 : vector<23x16xf32>
    %cst_9 = arith.constant dense<0xFF800000> : vector<16xf32>
    %26 = vector.multi_reduction <maximumf>, %11, %cst_9 [0] : vector<23x16xf32> to vector<16xf32>
    %27 = vector.shape_cast %26 : vector<16xf32> to vector<1x16xf32>
    %28 = vector.broadcast %27 : vector<1x16xf32> to vector<23x16xf32>
    %29 = arith.subf %11, %28 : vector<23x16xf32>
    %30 = math.exp %29 : vector<23x16xf32>
    %cst_10 = arith.constant dense<0.000000e+00> : vector<16xf32>
    %31 = vector.multi_reduction <add>, %30, %cst_10 [0] : vector<23x16xf32> to vector<16xf32>
    %32 = vector.shape_cast %31 : vector<16xf32> to vector<1x16xf32>
    %33 = math.log %32 : vector<1x16xf32>
    %34 = vector.broadcast %33 : vector<1x16xf32> to vector<23x16xf32>
    %35 = arith.subf %29, %34 : vector<23x16xf32>
    %36 = arith.mulf %25, %35 : vector<23x16xf32>
    %cst_11 = arith.constant dense<0.000000e+00> : vector<16xf32>
    %37 = vector.multi_reduction <add>, %36, %cst_11 [0] : vector<23x16xf32> to vector<16xf32>
    %38 = vector.shape_cast %37 : vector<16xf32> to vector<1x16xf32>
    %cst_12 = arith.constant 0.000000e+00 : f32
    %39 = vector.broadcast %cst_12 : f32 to vector<1x16xf32>
    %40 = arith.subf %39, %38 : vector<1x16xf32>
    %c0_13 = arith.constant 0 : index
    %c0_14 = arith.constant 0 : index
    %41 = vector.load %arg3[%c0_13, %c0_14] : memref<1x16xf32, #tpu.memory_space<vmem>>, vector<1x16xf32>
    tpu.vector_store %arg3[%c0_13, %c0_14], %40 {strides = array<i32>} : memref<1x16xf32, #tpu.memory_space<vmem>>, vector<1x16xf32>,
    return
  }
  func.func @transform_0(%arg0: i32) -> (i32, i32) {
    %c0_i32 = arith.constant 0 : i32
    %c0_i32_0 = arith.constant 0 : i32
    return %c0_i32, %arg0 : i32, i32
  }
  func.func @transform_1(%arg0: i32) -> (i32, i32) {
    %c0_i32 = arith.constant 0 : i32
    %c0_i32_0 = arith.constant 0 : i32
    return %c0_i32, %arg0 : i32, i32
  }
  func.func @transform_2(%arg0: i32) -> (i32, i32) {
    %c0_i32 = arith.constant 0 : i32
    %c0_i32_0 = arith.constant 0 : i32
    return %c0_i32, %arg0 : i32, i32
  }
}

</mosaic_0001>

<llo_original>
// kernel: tpu_custom_call.1
$region0: #{tpu_custom_call.1}
  #allocation0 [shape = 'u32[]', space=smem, size = 0x4, offset = 0x4, fixed_abs, tag = 'smem constant byte address 0x4 - core index']
  #allocation1 [shape = 'u32[144,128]{1,0:T(1,128)}', space=vmem, size = 0x12000, scoped, tag = 'internal scratch']
  %s0 = inlined_call_operand.vmem [shape: f32[23,16], index: 0, kind: input, shape index: {}]
  %s1 = inlined_call_operand.vmem [shape: f32[23,16], index: 1, kind: input, shape index: {}]
  %s2 = inlined_call_operand.hbm [shape: f32[1,16], index: 2, kind: output, shape index: {}]
  %s3 = sld [smem:[#allocation0]]
  $region18: #{tpu_custom_call.1} parent=0
    _
  %s5 = ssub.s32 1, %s3
  %s6 = scalar_select 0, %s5, %s3
  $region1: #{tpu_custom_call.1} parent=0
    #allocation2 [shape = 'u8[512]{0}', space=vmem, size = 0x400, scoped, tag = 'output window, operand 0, single buffered']
    #allocation3 [shape = 's32[1]{0}', space=sflag, size = 0x4, scoped, tag = 'scoped memory for tpu_custom_call.1']
    %7 = vsyncpa [#allocation3], 0
    // Predicated region
    $region2: #{tpu_custom_call.1} parent=1 // pred_check
      _
    $region3: #{tpu_custom_call.1} parent=1 // pred_check_branch
      %9 = sbr.rel (0) target = $region5
    $region4: #{tpu_custom_call.1} parent=1 // pred_region
      _
    $region5: #{tpu_custom_call.1} parent=1 // pred_fallthru
      _
    // Predicated region
    $region6: #{tpu_custom_call.1} parent=1 // pred_check
      _
    $region7: #{tpu_custom_call.1} parent=1 // pred_check_branch
      %11 = sbr.rel (0) target = $region9
    $region8: #{tpu_custom_call.1} parent=1 // pred_region
      _
    $region9: #{tpu_custom_call.1} parent=1 // pred_fallthru
      _
    %v12 = vld [vmem:[%s0] sm:$0xff]
    %v13 = vld [vmem:[%s0 + $0x8] sm:$0xff]
    %v14 = vld [vmem:[%s0 + $0x10] sm:$0x7f]
    %v15 = vld [vmem:[%s1] sm:$0xff]
    %v16 = vld [vmem:[%s1 + $0x8] sm:$0xff]
    %v17 = vld [vmem:[%s1 + $0x10] sm:$0x7f]
    %v18 = vlaneseq
    %v19 = vand.u32 %v18, 127
    %s20 = smul.u32 0, 16
    %v21 = vstv %s20
    %v22 = vadd.s32 %v19, %v21
    %vm23 = vcmp.lt.s32.totalorder %v22, 16
    %v24 = vsel %vm23, 1, 0
    %vm25 = vcmp.eq.s32.totalorder %v24, 1
    %v26 = vsel %vm25, %v12, 0.0
    %v27 = vsel %vm25, %v13, 0.0
    %v28 = vsel %vm25, %v14, 0.0
    %v29 = vsel %vm25, %v15, 0.0
    %v30 = vsel %vm25, %v16, 0.0
    %v31 = vsel %vm25, %v17, 0.0
    %vm32 = vcmask 130048
    %v33 = vsel %vm32, %v29, 0.0
    %v34 = vsel %vm32, %v30, 0.0
    %v35 = vadd.f32 %v33, %v34
    %vm36 = vcmask 129024
    %v37 = vsel %vm36, %v31, 0.0
    %v38 = vadd.f32 %v35, %v37
    %v39 = vrot.slane %v38, 4
    %v40 = vadd.f32 %v38, %v39
    %v41 = vrot.slane %v40, 2
    %v42 = vadd.f32 %v40, %v41
    %v43 = vrot.slane %v42, 1
    %v44 = vadd.f32 %v42, %v43
    %vm45 = vcmp.ne.f32.partialorder %v44, 0.0
    %v46 = vsel %vm45, %v44, 1.0
    %v47 = vrcp.pop %v46
    %v48 = vmul.f32 1.0, %v47
    %v49 = vmul.f32 %v29, %v48
    %v50 = vmul.f32 %v30, %v48
    %v51 = vmul.f32 %v31, %v48
    %v52 = vsel %vm32, %v26, -inf
    %v53 = vsel %vm32, %v27, -inf
    %v54 = vsel %vm36, %v28, -inf
    %v55 = vmax.f32 %v52, %v53
    %v56 = vmax.f32 %v55, %v54
    %v57 = vrot.slane %v56, 4
    %v58 = vmax.f32 %v56, %v57
    %v59 = vrot.slane %v58, 2
    %v60 = vmax.f32 %v58, %v59
    %v61 = vrot.slane %v60, 1
    %v62 = vmax.f32 %v60, %v61
    %v63 = vsub.f32 %v26, %v62
    %v64 = vsub.f32 %v27, %v62
    %v65 = vsub.f32 %v28, %v62
    %v66 = vmul.f32 %v63, 1.442695
    %v67 = vpow.pop %v66
    %v68 = vmul.f32 %v64, 1.442695
    %v69 = vpow.pop %v68
    %v70 = vmul.f32 %v65, 1.442695
    %v71 = vpow.pop %v70
    %v72 = vsel %vm32, %v67, 0.0
    %v73 = vsel %vm32, %v69, 0.0
    %v74 = vadd.f32 %v72, %v73
    %v75 = vsel %vm36, %v71, 0.0
    %v76 = vadd.f32 %v74, %v75
    %v77 = vrot.slane %v76, 4
    %v78 = vadd.f32 %v76, %v77
    %v79 = vrot.slane %v78, 2
    %v80 = vadd.f32 %v78, %v79
    %v81 = vrot.slane %v80, 1
    %v82 = vadd.f32 %v80, %v81
    %v83 = vlog2.pop %v82
    %v84 = vmul.f32 %v83, 0.6931472
    %v85 = vsub.f32 %v63, %v84
    %v86 = vsub.f32 %v64, %v84
    %v87 = vsub.f32 %v65, %v84
    %v88 = vmul.f32 %v49, %v85
    %v89 = vmul.f32 %v50, %v86
    %v90 = vmul.f32 %v51, %v87
    %v91 = vsel %vm32, %v88, 0.0
    %v92 = vsel %vm32, %v89, 0.0
    %v93 = vadd.f32 %v91, %v92
    %v94 = vsel %vm36, %v90, 0.0
    %v95 = vadd.f32 %v93, %v94
    %v96 = vrot.slane %v95, 4
    %v97 = vadd.f32 %v95, %v96
    %v98 = vrot.slane %v97, 2
    %v99 = vadd.f32 %v97, %v98
    %v100 = vrot.slane %v99, 1
    %v101 = vadd.f32 %v99, %v100
    %v102 = vsub.f32 0.0, %v101
    %vm103 = vcmask 122880
    %104 = vst.msk [vmem:[#allocation2] sm:$0x1] %vm103, %v102
    // Predicated region
    $region10: #{tpu_custom_call.1} parent=1 // pred_check
      _
    $region11: #{tpu_custom_call.1} parent=1 // pred_check_branch
      %106 = sbr.rel (0) target = $region13
    $region12: #{tpu_custom_call.1} parent=1 // pred_region
      %s108 = ssub.s32 16, 16
      %109 = vsyncadd [#allocation3], %s108
      %s111 = sshll.u32 [#allocation2], 4
      %s112 = int_to_ptr.vmem [resolvable:$true] %s111
      %114 = dma.vmem_to_hbm [thread:$0]  %s112, 16, %s2, [#allocation3]
    $region13: #{tpu_custom_call.1} parent=1 // pred_fallthru
      _
    // Predicated region
    $region14: #{tpu_custom_call.1} parent=1 // pred_check
      _
    $region15: #{tpu_custom_call.1} parent=1 // pred_check_branch
      %116 = sbr.rel (0) target = $region17
    $region16: #{tpu_custom_call.1} parent=1 // pred_region
      %117 = dma.done [#allocation3], 16
    $region17: #{tpu_custom_call.1} parent=1 // pred_fallthru
      _
    %118 = vsyncpa [#allocation3], 1

</llo_original>
